<compile_context>
chip_gen: v7x
topology: tpu7x:2x2x1
jax: 0.10.0
libtpu: 0.0.40
codegen_flags: <defaults>
</compile_context>

<pallas_src>
import functools

import jax
import jax.numpy as jnp
import numpy as np
from jax.experimental import pallas as pl
from jax.experimental.pallas import tpu as pltpu

BN_EPS = 1e-5


def _arm_kernel(x_ref, w_ref, b_ref, o_ref, *, last_arm, inv_hw):
    # x_ref: (Tn, HW, C) channels-last slab; w_ref: (C_in, C_out); b_ref: (1, C)
    x = x_ref[...].astype(jnp.float32)                       # (Tn, HW, C)

    # Global average pool over spatial dims (sublane reduction, lane-dense in C).
    pool = jnp.sum(x, axis=1) * inv_hw                       # (Tn, C)

    # 1x1 conv with BN folded in: y = pool @ W'^T + b'   (W passed pre-transposed).
    y = jnp.dot(pool, w_ref[...],
                preferred_element_type=jnp.float32) + b_ref[...]   # (Tn, C)

    weights = jax.nn.sigmoid(y)                              # (Tn, C)

    if last_arm:
        # mean(weights * x) over HW == weights * pool, so the fused per-channel
        # scale for the final output is weights^2 * pool (one pass over x, no
        # second full-slab reduction).
        scale = weights * weights * pool
    else:
        scale = weights

    # Single streaming multiply; lane-dense store in C.
    o_ref[...] = (scale[:, None, :] * x).astype(o_ref.dtype)


def _pick_block_n(N, HW, C, itemsize, budget_bytes=32 << 20):
    """Largest divisor of N whose double-buffered in+out slabs fit the budget,
    while keeping >= 2 grid steps when N >= 2 (both v7x TensorCores busy)."""
    max_tn = max(1, N // 2) if N >= 2 else 1
    tn = 1
    for cand in range(1, max_tn + 1):
        if N % cand == 0 and 4 * cand * HW * C * itemsize <= budget_bytes:
            tn = cand
    return tn


def attention_refinement_module(x, params, *, last_arm=False, block_n=None):
    """x: (N, C, H, W). params: dict of conv/bn params (PyTorch shapes)."""
    N, C, H, W = x.shape
    HW = H * W

    # Channels-last layout: (N, HW, C) so C sits on the lane axis.
    x_cl = jnp.transpose(x, (0, 2, 3, 1)).reshape(N, HW, C)

    # Fold BatchNorm (inference) into the 1x1 conv.
    conv_w = params["conv_w"].reshape(C, C).astype(jnp.float32)   # (C_out, C_in)
    conv_b = params["conv_b"].reshape(C).astype(jnp.float32)
    gamma = params["bn_gamma"].reshape(C).astype(jnp.float32)
    beta = params["bn_beta"].reshape(C).astype(jnp.float32)
    r_mean = params["bn_mean"].reshape(C).astype(jnp.float32)
    r_var = params["bn_var"].reshape(C).astype(jnp.float32)

    bn_scale = gamma * jax.lax.rsqrt(r_var + BN_EPS)               # (C,)
    w_folded = bn_scale[:, None] * conv_w                          # (C_out, C_in)
    b_folded = bn_scale * (conv_b - r_mean) + beta                 # (C,)

    w_t = jnp.transpose(w_folded)                                  # (C_in, C_out)
    b_row = b_folded.reshape(1, C)                                 # lane-major

    itemsize = jnp.dtype(x.dtype).itemsize
    if block_n is None:
        block_n = _pick_block_n(N, HW, C, itemsize)
    assert N % block_n == 0, "block_n must divide N"

    # VMEM budget: double-buffered input + output slabs + params + headroom.
    slab_bytes = block_n * HW * C * itemsize
    param_bytes = (C * C + 2 * C * 128) * 4
    vmem_bytes = int(4 * slab_bytes + 2 * param_bytes + (2 << 20))
    vmem_bytes = min(max(vmem_bytes, 4 << 20), 64 << 20)

    kernel = functools.partial(_arm_kernel, last_arm=last_arm, inv_hw=1.0 / HW)

    out_cl = pl.pallas_call(
        kernel,
        out_shape=jax.ShapeDtypeStruct((N, HW, C), x.dtype),
        grid=(N // block_n,),
        in_specs=[
            pl.BlockSpec((block_n, HW, C), lambda n: (n, 0, 0)),   # x slab
            pl.BlockSpec((C, C), lambda n: (0, 0)),                # folded W^T
            pl.BlockSpec((1, C), lambda n: (0, 0)),                # folded bias
        ],
        out_specs=pl.BlockSpec((block_n, HW, C), lambda n: (n, 0, 0)),
        compiler_params=pltpu.CompilerParams(
            dimension_semantics=("parallel",),
            vmem_limit_bytes=vmem_bytes),
    )(x_cl, w_t, b_row)

    # Back to NCHW to match the PyTorch module's interface.
    return jnp.transpose(out_cl.reshape(N, H, W, C), (0, 3, 1, 2))


def _reference(x, params, *, last_arm=False):
    """Pure-JAX reference (mirrors the PyTorch module in eval mode)."""
    N, C, H, W = x.shape
    pool = jnp.mean(x, axis=(2, 3), keepdims=True)                  # (N,C,1,1)
    w = params["conv_w"].reshape(C, C)
    y = jnp.einsum("oc,ncij->noij", w, pool) + params["conv_b"].reshape(1, C, 1, 1)
    inv_std = jax.lax.rsqrt(params["bn_var"].reshape(1, C, 1, 1) + BN_EPS)
    y = (y - params["bn_mean"].reshape(1, C, 1, 1)) * inv_std \
        * params["bn_gamma"].reshape(1, C, 1, 1) + params["bn_beta"].reshape(1, C, 1, 1)
    weights = jax.nn.sigmoid(y)
    out = weights * x
    if last_arm:
        w2 = jnp.mean(out, axis=(2, 3), keepdims=True)
        out = w2 * out
    return out


def _init_params(key, C):
    k1, k2, k3, k4, k5, k6 = jax.random.split(key, 6)
    return {
        "conv_w": jax.random.normal(k1, (C, C, 1, 1), jnp.float32) * 0.1,
        "conv_b": jax.random.normal(k2, (C,), jnp.float32) * 0.1,
        "bn_gamma": 1.0 + 0.1 * jax.random.normal(k3, (C,), jnp.float32),
        "bn_beta": 0.1 * jax.random.normal(k4, (C,), jnp.float32),
        "bn_mean": 0.1 * jax.random.normal(k5, (C,), jnp.float32),
        "bn_var": jnp.abs(jax.random.normal(k6, (C,), jnp.float32)) + 0.5,
    }


if __name__ == "__main__":
    key = jax.random.PRNGKey(0)
    kx, kp = jax.random.split(key)

    N, C, H, W = 2, 4, 16, 16
    x = jax.random.normal(kx, (N, C, H, W), jnp.float32)
    params = _init_params(kp, C)

    ok = True
    for last_arm in (False, True):
        out = attention_refinement_module(x, params, last_arm=last_arm)
        out = jax.block_until_ready(out)
        ref = jax.block_until_ready(_reference(x, params, last_arm=last_arm))
        if not np.allclose(np.asarray(out), np.asarray(ref), rtol=1e-5, atol=1e-5):
            ok = False

    if ok:
        print("KERNEL_OK")
</pallas_src>

<mosaic_0001>
module attributes {stable_mosaic.version = 11 : i64} {
  func.func @_arm_kernel(%arg0: i32, %arg1: memref<1x256x4xf32, #tpu.memory_space<vmem>>, %arg2: memref<4x4xf32, #tpu.memory_space<vmem>>, %arg3: memref<1x4xf32, #tpu.memory_space<vmem>>, %arg4: memref<1x256x4xf32, #tpu.memory_space<vmem>>) attributes {dimension_semantics = [#tpu.dimension_semantics<parallel>], iteration_bounds = array<i64: 2>, scalar_prefetch = 0 : i64, scratch_operands = 0 : i64, tpu.core_type = #tpu.core_type<tc>, window_params = [{transform_indices = @transform_0, window_bounds = array<i64: 1, 256, 4>}, {pipeline_mode = #tpu.pipeline_mode<synchronous>, transform_indices = @transform_1, window_bounds = array<i64: 4, 4>}, {pipeline_mode = #tpu.pipeline_mode<synchronous>, transform_indices = @transform_2, window_bounds = array<i64: 1, 4>}, {transform_indices = @transform_3, window_bounds = array<i64: 1, 256, 4>}]} {
    %c0 = arith.constant 0 : index
    %c0_0 = arith.constant 0 : index
    %c0_1 = arith.constant 0 : index
    %0 = vector.load %arg1[%c0, %c0_0, %c0_1] : memref<1x256x4xf32, #tpu.memory_space<vmem>>, vector<1x256x4xf32>
    %cst = arith.constant dense<0.000000e+00> : vector<1x4xf32>
    %1 = vector.multi_reduction <add>, %0, %cst [1] : vector<1x256x4xf32> to vector<1x4xf32>
    %cst_2 = arith.constant 3.906250e-03 : f32
    %2 = vector.broadcast %cst_2 : f32 to vector<1x4xf32>
    %3 = arith.mulf %1, %2 : vector<1x4xf32>
    %c0_3 = arith.constant 0 : index
    %c0_4 = arith.constant 0 : index
    %4 = vector.load %arg2[%c0_3, %c0_4] : memref<4x4xf32, #tpu.memory_space<vmem>>, vector<4x4xf32>
    %cst_5 = arith.constant dense<0.000000e+00> : vector<1x4xf32>
    %5 = tpu.matmul %3, %4, %cst_5 {dimension_numbers = #tpu.dot_dimension_numbers<[1], [0], [0], [1], [0, 0, 1, 1], [], []>} : vector<1x4xf32>, vector<4x4xf32>, vector<1x4xf32> -> vector<1x4xf32>
    %c0_6 = arith.constant 0 : index
    %c0_7 = arith.constant 0 : index
    %6 = vector.load %arg3[%c0_6, %c0_7] : memref<1x4xf32, #tpu.memory_space<vmem>>, vector<1x4xf32>
    %7 = arith.addf %5, %6 : vector<1x4xf32>
    %8 = arith.negf %7 : vector<1x4xf32>
    %9 = math.exp %8 : vector<1x4xf32>
    %cst_8 = arith.constant 1.000000e+00 : f32
    %10 = vector.broadcast %cst_8 : f32 to vector<1x4xf32>
    %11 = arith.addf %10, %9 : vector<1x4xf32>
    %12 = arith.divf %10, %11 : vector<1x4xf32>
    %13 = vector.shape_cast %12 : vector<1x4xf32> to vector<1x1x4xf32>
    %14 = vector.broadcast %13 : vector<1x1x4xf32> to vector<1x256x4xf32>
    %15 = arith.mulf %14, %0 : vector<1x256x4xf32>
    %c0_9 = arith.constant 0 : index
    %c0_10 = arith.constant 0 : index
    %c0_11 = arith.constant 0 : index
    %16 = vector.load %arg4[%c0_9, %c0_10, %c0_11] : memref<1x256x4xf32, #tpu.memory_space<vmem>>, vector<1x256x4xf32>
    tpu.vector_store %arg4[%c0_9, %c0_10, %c0_11], %15 {strides = array<i32>} : memref<1x256x4xf32, #tpu.memory_space<vmem>>, vector<1x256x4xf32>,
    return
  }
  func.func @transform_0(%arg0: i32) -> (i32, i32, i32) {
    %c0_i32 = arith.constant 0 : i32
    %c0_i32_0 = arith.constant 0 : i32
    %c0_i32_1 = arith.constant 0 : i32
    return %arg0, %c0_i32, %c0_i32_0 : i32, i32, i32
  }
  func.func @transform_1(%arg0: i32) -> (i32, i32) {
    %c0_i32 = arith.constant 0 : i32
    %c0_i32_0 = arith.constant 0 : i32
    %c0_i32_1 = arith.constant 0 : i32
    return %c0_i32, %c0_i32_0 : i32, i32
  }
  func.func @transform_2(%arg0: i32) -> (i32, i32) {
    %c0_i32 = arith.constant 0 : i32
    %c0_i32_0 = arith.constant 0 : i32
    %c0_i32_1 = arith.constant 0 : i32
    return %c0_i32, %c0_i32_0 : i32, i32
  }
  func.func @transform_3(%arg0: i32) -> (i32, i32, i32) {
    %c0_i32 = arith.constant 0 : i32
    %c0_i32_0 = arith.constant 0 : i32
    %c0_i32_1 = arith.constant 0 : i32
    return %arg0, %c0_i32, %c0_i32_0 : i32, i32, i32
  }
}

</mosaic_0001>

<llo_original>
// kernel: tpu_custom_call.1
$region0: #{tpu_custom_call.1}
  #allocation0 [shape = 'u32[]', space=smem, size = 0x4, offset = 0x4, fixed_abs, tag = 'smem constant byte address 0x4 - core index']
  #allocation1 [shape = 'u32[144,128]{1,0:T(1,128)}', space=vmem, size = 0x12000, scoped, tag = 'internal scratch']
  %s0 = inlined_call_operand.vmem [shape: f32[2,256,4], index: 0, kind: input, shape index: {}]
  %s1 = inlined_call_operand.vmem [shape: f32[4,4], index: 1, kind: input, shape index: {}]
  %s2 = inlined_call_operand.vmem [shape: f32[1,4], index: 2, kind: input, shape index: {}]
  %s3 = inlined_call_operand.vmem [shape: f32[2,256,4], index: 3, kind: output, shape index: {}]
  %s4 = sld [smem:[#allocation0]]
  $region45: #{tpu_custom_call.1} parent=0
    _
  %s6 = ssub.s32 1, %s4
  %s7 = scalar_select 0, %s6, %s4
  loop: start=0, step=1, limit=4
  $region2: #{tpu_custom_call.1} parent=0 // loop_pre_header
    _
  $region3: #{tpu_custom_call.1} parent=0 // loop_header
    %s9 = sphi 0, %s13
    %p10 = scmp.ge.s32.totalorder %s9, 4
    %s19 = sphi 0, %s21
    %s22 = sphi 0, %s19
    %s23 = sphi 0, %s22
    %s39 = sphi 0, %s23
    %s43 = sphi 0, %s43
    %s45 = sphi 0, %s43
    %s46 = sphi 0, %s45
    %s60 = sphi 0, %s46
    %s64 = sphi 0, %s64
    %s66 = sphi 0, %s64
    %s67 = sphi 0, %s66
    %s81 = sphi 0, %s67
    %s87 = sphi 0, %s89
    %s90 = sphi 0, %s87
    %s91 = sphi 0, %s90
    %s107 = sphi 0, %s91
  $region4: #{tpu_custom_call.1} parent=0 // loop_header_branch
    %12 = sbr.rel (%p10) target = $region8
  $region5: #{tpu_custom_call.1} parent=0 // loop_body
    %s14 = ssub.s32 %s9, 1
    %s15 = ssub.s32 %s9, 2
    %s16 = sadd.s32 %s9, 1
    %s17 = ssub.s32 %s9, %s16
    %p18 = scmp.eq.s32.totalorder %s17, 0
    %s20 = sadd.s32 %s19, 1
    %s21 = scalar_select %p18, %s19, %s20
    %p24 = pneg %p18
    %p25 = scmp.eq.s32.totalorder %s9, 1
    %p26 = por %p24, %p25
    %p27 = scmp.ne.s32.totalorder %s19, %s22
    %p28 = scmp.eq.s32.totalorder %s9, 0
    %p29 = por %p27, %p28
    %p30 = scmp.ne.s32.totalorder %s19, %s22
    %p31 = scmp.eq.s32.totalorder %s14, 1
    %p32 = por %p30, %p31
    %p33 = scmp.ne.s32.totalorder %s22, %s23
    %p34 = scmp.eq.s32.totalorder %s14, 0
    %p35 = por %p33, %p34
    %p36 = scmp.ne.s32.totalorder %s22, %s23
    %p37 = scmp.eq.s32.totalorder %s15, 1
    %p38 = por %p36, %p37
    %p40 = scmp.ne.s32.totalorder %s23, %s39
    %p41 = scmp.eq.s32.totalorder %s15, 0
    %p42 = por %p40, %p41
    %s44 = sadd.s32 %s43, 1
    %p47 = scmp.eq.s32.totalorder %s9, 1
    %p48 = scmp.ne.s32.totalorder %s43, %s45
    %p49 = scmp.eq.s32.totalorder %s9, 0
    %p50 = por %p48, %p49
    %p51 = scmp.ne.s32.totalorder %s43, %s45
    %p52 = scmp.eq.s32.totalorder %s14, 1
    %p53 = por %p51, %p52
    %p54 = scmp.ne.s32.totalorder %s45, %s46
    %p55 = scmp.eq.s32.totalorder %s14, 0
    %p56 = por %p54, %p55
    %p57 = scmp.ne.s32.totalorder %s45, %s46
    %p58 = scmp.eq.s32.totalorder %s15, 1
    %p59 = por %p57, %p58
    %p61 = scmp.ne.s32.totalorder %s46, %s60
    %p62 = scmp.eq.s32.totalorder %s15, 0
    %p63 = por %p61, %p62
    %s65 = sadd.s32 %s64, 1
    %p68 = scmp.eq.s32.totalorder %s9, 1
    %p69 = scmp.ne.s32.totalorder %s64, %s66
    %p70 = scmp.eq.s32.totalorder %s9, 0
    %p71 = por %p69, %p70
    %p72 = scmp.ne.s32.totalorder %s64, %s66
    %p73 = scmp.eq.s32.totalorder %s14, 1
    %p74 = por %p72, %p73
    %p75 = scmp.ne.s32.totalorder %s66, %s67
    %p76 = scmp.eq.s32.totalorder %s14, 0
    %p77 = por %p75, %p76
    %p78 = scmp.ne.s32.totalorder %s66, %s67
    %p79 = scmp.eq.s32.totalorder %s15, 1
    %p80 = por %p78, %p79
    %p82 = scmp.ne.s32.totalorder %s67, %s81
    %p83 = scmp.eq.s32.totalorder %s15, 0
    %p84 = por %p82, %p83
    %s85 = ssub.s32 %s9, %s16
    %p86 = scmp.eq.s32.totalorder %s85, 0
    %s88 = sadd.s32 %s87, 1
    %s89 = scalar_select %p86, %s87, %s88
    %p92 = pneg %p86
    %p93 = scmp.eq.s32.totalorder %s9, 1
    %p94 = por %p92, %p93
    %p95 = scmp.ne.s32.totalorder %s87, %s90
    %p96 = scmp.eq.s32.totalorder %s9, 0
    %p97 = por %p95, %p96
    %p98 = scmp.ne.s32.totalorder %s87, %s90
    %p99 = scmp.eq.s32.totalorder %s14, 1
    %p100 = por %p98, %p99
    %p101 = scmp.ne.s32.totalorder %s90, %s91
    %p102 = scmp.eq.s32.totalorder %s14, 0
    %p103 = por %p101, %p102
    %p104 = scmp.ne.s32.totalorder %s90, %s91
    %p105 = scmp.eq.s32.totalorder %s15, 1
    %p106 = por %p104, %p105
    %p108 = scmp.ne.s32.totalorder %s91, %s107
    %p109 = scmp.eq.s32.totalorder %s15, 0
    %p110 = por %p108, %p109
    %p111 = scmp.le.s32.totalorder 1, %s9
    %p112 = scmp.lt.s32.totalorder %s9, 3
    %p113 = pnand %p111, %p112
    %p114 = pneg %p113
    // Predicated region
    $region9: #{tpu_custom_call.1} parent=5 // pred_check
      _
    $region10: #{tpu_custom_call.1} parent=5 // pred_check_branch
      %116 = sbr.rel (%p113) target = $region12
    $region11: #{tpu_custom_call.1} parent=5 // pred_region
      %s117 = ssub.s32 %s9, 1
      // Predicated region
      $region13: #{tpu_custom_call.1} parent=11 // pred_check
        %p118 = pneg %p56
      $region14: #{tpu_custom_call.1} parent=11 // pred_check_branch
        %120 = sbr.rel (%p118) target = $region16
      $region15: #{tpu_custom_call.1} parent=11 // pred_region
        _
      $region16: #{tpu_custom_call.1} parent=11 // pred_fallthru
        _
      // Predicated region
      $region17: #{tpu_custom_call.1} parent=11 // pred_check
        %p121 = pneg %p77
      $region18: #{tpu_custom_call.1} parent=11 // pred_check_branch
        %123 = sbr.rel (%p121) target = $region20
      $region19: #{tpu_custom_call.1} parent=11 // pred_region
        _
      $region20: #{tpu_custom_call.1} parent=11 // pred_fallthru
        _
    $region12: #{tpu_custom_call.1} parent=5 // pred_fallthru
      _
    %p124 = scmp.lt.s32.totalorder %s9, 2
    // Predicated region
    $region21: #{tpu_custom_call.1} parent=5 // pred_check
      %p125 = pneg %p124
    $region22: #{tpu_custom_call.1} parent=5 // pred_check_branch
      %127 = sbr.rel (%p125) target = $region24
    $region23: #{tpu_custom_call.1} parent=5 // pred_region
      // Predicated region
      $region25: #{tpu_custom_call.1} parent=23 // pred_check
        %p128 = pneg %p29
      $region26: #{tpu_custom_call.1} parent=23 // pred_check_branch
        %130 = sbr.rel (%p128) target = $region28
      $region27: #{tpu_custom_call.1} parent=23 // pred_region
        %p131 = scmp.lt.s32.totalorder %s9, 1
        %s132 = scalar_select %p131, %s9, 1
        %s133 = smul.addr %s132, 32
        %s134 = smul.addr %s133, 8
        %s135 = scalar_lea.vmem %s0, %s134
      $region28: #{tpu_custom_call.1} parent=23 // pred_fallthru
        _
    $region24: #{tpu_custom_call.1} parent=5 // pred_fallthru
      _
    %p136 = scmp.le.s32.totalorder 1, %s9
    %p137 = scmp.lt.s32.totalorder %s9, 3
    %p138 = pnand %p136, %p137
    %p139 = pneg %p138
    // Predicated region
    $region29: #{tpu_custom_call.1} parent=5 // pred_check
      _
    $region30: #{tpu_custom_call.1} parent=5 // pred_check_branch
      %141 = sbr.rel (%p138) target = $region32
    $region31: #{tpu_custom_call.1} parent=5 // pred_region
      %s142 = ssub.s32 %s9, 1
      %p143 = scmp.lt.s32.totalorder %s14, 1
      %s144 = scalar_select %p143, %s14, 1
      %s145 = smul.addr %s144, 32
      %s146 = smul.addr %s145, 8
      %s147 = scalar_lea.vmem %s0, %s146
      %p148 = pneg %p35
      %p149 = pneg %p32
      %p150 = pneg %p56
      %p151 = pneg %p53
      %p152 = pneg %p77
      %p153 = pneg %p74
      %p154 = pneg %p103
      %p155 = pneg %p100
      %p156 = scmp.lt.s32.totalorder %s14, 1
      %s157 = scalar_select %p156, %s14, 1
      %s158 = smul.addr %s157, 32
      %s159 = smul.addr %s158, 8
      %s160 = scalar_lea.vmem %s3, %s159
      %p161 = scmp.lt.s32.totalorder %s14, 1
      %s162 = scalar_select %p161, %s14, 1
      %s163 = smul.addr %s162, 32
      %s164 = smul.addr %s163, 8
      %s165 = scalar_lea.vmem %s0, %s164
      %p166 = scmp.lt.s32.totalorder %s14, 1
      %s167 = scalar_select %p166, %s14, 1
      %s168 = smul.addr %s167, 32
      %s169 = smul.addr %s168, 8
      %s170 = scalar_lea.vmem %s3, %s169
      %v171 = vld [vmem:[%s165] sm:$0xff]
      %v172 = vld [vmem:[%s165 + $0x8] sm:$0xff]
      %v173 = vld [vmem:[%s165 + $0x10] sm:$0xff]
      %v174 = vld [vmem:[%s165 + $0x18] sm:$0xff]
      %v175 = vld [vmem:[%s165 + $0x20] sm:$0xff]
      %v176 = vld [vmem:[%s165 + $0x28] sm:$0xff]
      %v177 = vld [vmem:[%s165 + $0x30] sm:$0xff]
      %v178 = vld [vmem:[%s165 + $0x38] sm:$0xff]
      %v179 = vld [vmem:[%s165 + $0x40] sm:$0xff]
      %v180 = vld [vmem:[%s165 + $0x48] sm:$0xff]
      %v181 = vld [vmem:[%s165 + $0x50] sm:$0xff]
      %v182 = vld [vmem:[%s165 + $0x58] sm:$0xff]
      %v183 = vld [vmem:[%s165 + $0x60] sm:$0xff]
      %v184 = vld [vmem:[%s165 + $0x68] sm:$0xff]
      %v185 = vld [vmem:[%s165 + $0x70] sm:$0xff]
      %v186 = vld [vmem:[%s165 + $0x78] sm:$0xff]
      %v187 = vld [vmem:[%s165 + $0x80] sm:$0xff]
      %v188 = vld [vmem:[%s165 + $0x88] sm:$0xff]
      %v189 = vld [vmem:[%s165 + $0x90] sm:$0xff]
      %v190 = vld [vmem:[%s165 + $0x98] sm:$0xff]
      %v191 = vld [vmem:[%s165 + $0xa0] sm:$0xff]
      %v192 = vld [vmem:[%s165 + $0xa8] sm:$0xff]
      %v193 = vld [vmem:[%s165 + $0xb0] sm:$0xff]
      %v194 = vld [vmem:[%s165 + $0xb8] sm:$0xff]
      %v195 = vld [vmem:[%s165 + $0xc0] sm:$0xff]
      %v196 = vld [vmem:[%s165 + $0xc8] sm:$0xff]
      %v197 = vld [vmem:[%s165 + $0xd0] sm:$0xff]
      %v198 = vld [vmem:[%s165 + $0xd8] sm:$0xff]
      %v199 = vld [vmem:[%s165 + $0xe0] sm:$0xff]
      %v200 = vld [vmem:[%s165 + $0xe8] sm:$0xff]
      %v201 = vld [vmem:[%s165 + $0xf0] sm:$0xff]
      %v202 = vld [vmem:[%s165 + $0xf8] sm:$0xff]
      %vm203 = vcmask 31744
      %v204 = vsel %vm203, %v171, 0.0
      %v205 = vsel %vm203, %v172, 0.0
      %v206 = vadd.f32 %v204, %v205
      %v207 = vsel %vm203, %v173, 0.0
      %v208 = vadd.f32 %v206, %v207
      %v209 = vsel %vm203, %v174, 0.0
      %v210 = vadd.f32 %v208, %v209
      %v211 = vsel %vm203, %v175, 0.0
      %v212 = vadd.f32 %v210, %v211
      %v213 = vsel %vm203, %v176, 0.0
      %v214 = vadd.f32 %v212, %v213
      %v215 = vsel %vm203, %v177, 0.0
      %v216 = vadd.f32 %v214, %v215
      %v217 = vsel %vm203, %v178, 0.0
      %v218 = vadd.f32 %v216, %v217
      %v219 = vsel %vm203, %v179, 0.0
      %v220 = vadd.f32 %v218, %v219
      %v221 = vsel %vm203, %v180, 0.0
      %v222 = vadd.f32 %v220, %v221
      %v223 = vsel %vm203, %v181, 0.0
      %v224 = vadd.f32 %v222, %v223
      %v225 = vsel %vm203, %v182, 0.0
      %v226 = vadd.f32 %v224, %v225
      %v227 = vsel %vm203, %v183, 0.0
      %v228 = vadd.f32 %v226, %v227
      %v229 = vsel %vm203, %v184, 0.0
      %v230 = vadd.f32 %v228, %v229
      %v231 = vsel %vm203, %v185, 0.0
      %v232 = vadd.f32 %v230, %v231
      %v233 = vsel %vm203, %v186, 0.0
      %v234 = vadd.f32 %v232, %v233
      %v235 = vsel %vm203, %v187, 0.0
      %v236 = vadd.f32 %v234, %v235
      %v237 = vsel %vm203, %v188, 0.0
      %v238 = vadd.f32 %v236, %v237
      %v239 = vsel %vm203, %v189, 0.0
      %v240 = vadd.f32 %v238, %v239
      %v241 = vsel %vm203, %v190, 0.0
      %v242 = vadd.f32 %v240, %v241
      %v243 = vsel %vm203, %v191, 0.0
      %v244 = vadd.f32 %v242, %v243
      %v245 = vsel %vm203, %v192, 0.0
      %v246 = vadd.f32 %v244, %v245
      %v247 = vsel %vm203, %v193, 0.0
      %v248 = vadd.f32 %v246, %v247
      %v249 = vsel %vm203, %v194, 0.0
      %v250 = vadd.f32 %v248, %v249
      %v251 = vsel %vm203, %v195, 0.0
      %v252 = vadd.f32 %v250, %v251
      %v253 = vsel %vm203, %v196, 0.0
      %v254 = vadd.f32 %v252, %v253
      %v255 = vsel %vm203, %v197, 0.0
      %v256 = vadd.f32 %v254, %v255
      %v257 = vsel %vm203, %v198, 0.0
      %v258 = vadd.f32 %v256, %v257
      %v259 = vsel %vm203, %v199, 0.0
      %v260 = vadd.f32 %v258, %v259
      %v261 = vsel %vm203, %v200, 0.0
      %v262 = vadd.f32 %v260, %v261
      %v263 = vsel %vm203, %v201, 0.0
      %v264 = vadd.f32 %v262, %v263
      %v265 = vsel %vm203, %v202, 0.0
      %v266 = vadd.f32 %v264, %v265
      %v267 = vrot.slane %v266, 4
      %v268 = vadd.f32 %v266, %v267
      %v269 = vrot.slane %v268, 2
      %v270 = vadd.f32 %v268, %v269
      %v271 = vrot.slane %v270, 1
      %v272 = vadd.f32 %v270, %v271
      %v273 = vmul.f32 %v272, 0.00390625
      %v274 = vld [vmem:[%s1] sm:$0xf]
      %v275 = vld [vmem:[%s2] sm:$0x1]
      %v277 = vsel %vm203, %v273, 0
      %vm279 = vcmask 1043456
      %v281 = vsel %vm279, %v274, 0
      %283 = vmatprep.subr.mxu0 0.0
      %284 = vmatpush1.msra.mxu0 %v281
      %285 = vmatprep.subr.mxu0 0.0
      %286 = vmatpush1.msra.mxu0 0.0
      %287 = vmatprep.subr.mxu0 0.0
      %288 = vmatpush1.msra.mxu0 0.0
      %289 = vmatprep.subr.mxu0 0.0
      %290 = vmatpush1.msra.mxu0 0.0
      %291 = vmatprep.subr.mxu0 0.0
      %292 = vmatpush1.msra.mxu0 0.0
      %293 = vmatprep.subr.mxu0 0.0
      %294 = vmatpush1.msra.mxu0 0.0
      %295 = vmatprep.subr.mxu0 0.0
      %296 = vmatpush1.msra.mxu0 0.0
      %297 = vmatprep.subr.mxu0 0.0
      %298 = vmatpush1.msra.mxu0 0.0
      %299 = vmatprep.subr.mxu0 0.0
      %300 = vmatpush1.msra.mxu0 0.0
      %301 = vmatprep.subr.mxu0 0.0
      %302 = vmatpush1.msra.mxu0 0.0
      %303 = vmatprep.subr.mxu0 0.0
      %304 = vmatpush1.msra.mxu0 0.0
      %305 = vmatprep.subr.mxu0 0.0
      %306 = vmatpush1.msra.mxu0 0.0
      %307 = vmatprep.subr.mxu0 0.0
      %308 = vmatpush1.msra.mxu0 0.0
      %309 = vmatprep.subr.mxu0 0.0
      %310 = vmatpush1.msra.mxu0 0.0
      %311 = vmatprep.subr.mxu0 0.0
      %312 = vmatpush1.msra.mxu0 0.0
      %313 = vmatprep.subr.mxu0 0.0
      %314 = vmatpush1.msra.mxu0 0.0
      %315 = vmatprep.subr.mxu0 0.0
      %316 = vmatpush1.msra.mxu0 0.0
      %317 = vmatprep.subr.mxu0 0.0
      %318 = vmatpush1.msra.mxu0 0.0
      %319 = vmatprep.subr.mxu0 0.0
      %320 = vmatpush1.msra.mxu0 0.0
      %321 = vmatprep.subr.mxu0 0.0
      %322 = vmatpush1.msra.mxu0 0.0
      %323 = vmatprep.subr.mxu0 0.0
      %324 = vmatpush1.msra.mxu0 0.0
      %325 = vmatprep.subr.mxu0 0.0
      %326 = vmatpush1.msra.mxu0 0.0
      %327 = vmatprep.subr.mxu0 0.0
      %328 = vmatpush1.msra.mxu0 0.0
      %329 = vmatprep.subr.mxu0 0.0
      %330 = vmatpush1.msra.mxu0 0.0
      %331 = vmatprep.subr.mxu0 0.0
      %332 = vmatpush1.msra.mxu0 0.0
      %333 = vmatprep.subr.mxu0 0.0
      %334 = vmatpush1.msra.mxu0 0.0
      %335 = vmatprep.subr.mxu0 0.0
      %336 = vmatpush1.msra.mxu0 0.0
      %337 = vmatprep.subr.mxu0 0.0
      %338 = vmatpush1.msra.mxu0 0.0
      %339 = vmatprep.subr.mxu0 0.0
      %340 = vmatpush1.msra.mxu0 0.0
      %341 = vmatprep.subr.mxu0 0.0
      %342 = vmatpush1.msra.mxu0 0.0
      %343 = vmatprep.subr.mxu0 0.0
      %344 = vmatpush1.msra.mxu0 0.0
      %345 = vmatprep.subr.mxu0 0.0
      %346 = vmatpush1.msra.mxu0 0.0
      %347 = vmatprep.mubr.f32.mxu0 0.0
      %348 = vmatmul.mubr.f32.gmra.mrb[0].mxu0 %v277
      %v349 = vpop.f32.mrb[0].mxu0
      %v350 = vadd.f32 %v275, %v349
      %v351 = vpop.f32.mrb[0].mxu0
      %352 = vdwg.mxu0
      %v353 = vxor.u32 %v350, 2147483648
      %v354 = vmul.f32 %v353, 1.442695
      %v355 = vpow.pop %v354
      %v356 = vadd.f32 %v355, 1.0
      %v357 = vrcp.pop %v356
      %v358 = vmul.f32 1.0, %v357
      %v359 = vlaneseq
      %v360 = vshrl.u32 %v359, 7
      %v361 = vsub.s32 0, %v360
      %v362 = vrot.slane %v358, %v361
      %v363 = vmul.f32 %v362, %v171
      %v364 = vmul.f32 %v362, %v172
      %v365 = vmul.f32 %v362, %v173
      %v366 = vmul.f32 %v362, %v174
      %v367 = vmul.f32 %v362, %v175
      %v368 = vmul.f32 %v362, %v176
      %v369 = vmul.f32 %v362, %v177
      %v370 = vmul.f32 %v362, %v178
      %v371 = vmul.f32 %v362, %v179
      %v372 = vmul.f32 %v362, %v180
      %v373 = vmul.f32 %v362, %v181
      %v374 = vmul.f32 %v362, %v182
      %v375 = vmul.f32 %v362, %v183
      %v376 = vmul.f32 %v362, %v184
      %v377 = vmul.f32 %v362, %v185
      %v378 = vmul.f32 %v362, %v186
      %v379 = vmul.f32 %v362, %v187
      %v380 = vmul.f32 %v362, %v188
      %v381 = vmul.f32 %v362, %v189
      %v382 = vmul.f32 %v362, %v190
      %v383 = vmul.f32 %v362, %v191
      %v384 = vmul.f32 %v362, %v192
      %v385 = vmul.f32 %v362, %v193
      %v386 = vmul.f32 %v362, %v194
      %v387 = vmul.f32 %v362, %v195
      %v388 = vmul.f32 %v362, %v196
      %v389 = vmul.f32 %v362, %v197
      %v390 = vmul.f32 %v362, %v198
      %v391 = vmul.f32 %v362, %v199
      %v392 = vmul.f32 %v362, %v200
      %v393 = vmul.f32 %v362, %v201
      %v394 = vmul.f32 %v362, %v202
      %395 = vst.msk [vmem:[%s170] sm:$0xff] %vm203, %v363
      %396 = vst.msk [vmem:[%s170 + $0x8] sm:$0xff] %vm203, %v364
      %397 = vst.msk [vmem:[%s170 + $0x10] sm:$0xff] %vm203, %v365
      %398 = vst.msk [vmem:[%s170 + $0x18] sm:$0xff] %vm203, %v366
      %399 = vst.msk [vmem:[%s170 + $0x20] sm:$0xff] %vm203, %v367
      %400 = vst.msk [vmem:[%s170 + $0x28] sm:$0xff] %vm203, %v368
      %401 = vst.msk [vmem:[%s170 + $0x30] sm:$0xff] %vm203, %v369
      %402 = vst.msk [vmem:[%s170 + $0x38] sm:$0xff] %vm203, %v370
      %403 = vst.msk [vmem:[%s170 + $0x40] sm:$0xff] %vm203, %v371
      %404 = vst.msk [vmem:[%s170 + $0x48] sm:$0xff] %vm203, %v372
      %405 = vst.msk [vmem:[%s170 + $0x50] sm:$0xff] %vm203, %v373
      %406 = vst.msk [vmem:[%s170 + $0x58] sm:$0xff] %vm203, %v374
      %407 = vst.msk [vmem:[%s170 + $0x60] sm:$0xff] %vm203, %v375
      %408 = vst.msk [vmem:[%s170 + $0x68] sm:$0xff] %vm203, %v376
      %409 = vst.msk [vmem:[%s170 + $0x70] sm:$0xff] %vm203, %v377
      %410 = vst.msk [vmem:[%s170 + $0x78] sm:$0xff] %vm203, %v378
      %411 = vst.msk [vmem:[%s170 + $0x80] sm:$0xff] %vm203, %v379
      %412 = vst.msk [vmem:[%s170 + $0x88] sm:$0xff] %vm203, %v380
      %413 = vst.msk [vmem:[%s170 + $0x90] sm:$0xff] %vm203, %v381
      %414 = vst.msk [vmem:[%s170 + $0x98] sm:$0xff] %vm203, %v382
      %415 = vst.msk [vmem:[%s170 + $0xa0] sm:$0xff] %vm203, %v383
      %416 = vst.msk [vmem:[%s170 + $0xa8] sm:$0xff] %vm203, %v384
      %417 = vst.msk [vmem:[%s170 + $0xb0] sm:$0xff] %vm203, %v385
      %418 = vst.msk [vmem:[%s170 + $0xb8] sm:$0xff] %vm203, %v386
      %419 = vst.msk [vmem:[%s170 + $0xc0] sm:$0xff] %vm203, %v387
      %420 = vst.msk [vmem:[%s170 + $0xc8] sm:$0xff] %vm203, %v388
      %421 = vst.msk [vmem:[%s170 + $0xd0] sm:$0xff] %vm203, %v389
      %422 = vst.msk [vmem:[%s170 + $0xd8] sm:$0xff] %vm203, %v390
      %423 = vst.msk [vmem:[%s170 + $0xe0] sm:$0xff] %vm203, %v391
      %424 = vst.msk [vmem:[%s170 + $0xe8] sm:$0xff] %vm203, %v392
      %425 = vst.msk [vmem:[%s170 + $0xf0] sm:$0xff] %vm203, %v393
      %426 = vst.msk [vmem:[%s170 + $0xf8] sm:$0xff] %vm203, %v394
      %p427 = scmp.lt.s32.totalorder %s14, 1
      %s428 = scalar_select %p427, %s14, 1
      %s429 = smul.addr %s428, 32
      %s430 = smul.addr %s429, 8
      %s431 = scalar_lea.vmem %s3, %s430
      // Predicated region
      $region33: #{tpu_custom_call.1} parent=31 // pred_check
        %p432 = pneg %p100
      $region34: #{tpu_custom_call.1} parent=31 // pred_check_branch
        %434 = sbr.rel (%p432) target = $region36
      $region35: #{tpu_custom_call.1} parent=31 // pred_region
        _
      $region36: #{tpu_custom_call.1} parent=31 // pred_fallthru
        _
    $region32: #{tpu_custom_call.1} parent=5 // pred_fallthru
      _
    %p435 = scmp.le.s32.totalorder 2, %s9
    // Predicated region
    $region37: #{tpu_custom_call.1} parent=5 // pred_check
      %p436 = pneg %p435
    $region38: #{tpu_custom_call.1} parent=5 // pred_check_branch
      %438 = sbr.rel (%p436) target = $region40
    $region39: #{tpu_custom_call.1} parent=5 // pred_region
      %s439 = ssub.s32 %s9, 2
      // Predicated region
      $region41: #{tpu_custom_call.1} parent=39 // pred_check
        %p440 = pneg %p106
      $region42: #{tpu_custom_call.1} parent=39 // pred_check_branch
        %442 = sbr.rel (%p440) target = $region44
      $region43: #{tpu_custom_call.1} parent=39 // pred_region
        %p443 = scmp.lt.s32.totalorder %s15, 1
        %s444 = scalar_select %p443, %s15, 1
        %s445 = smul.addr %s444, 32
        %s446 = smul.addr %s445, 8
        %s447 = scalar_lea.vmem %s3, %s446
      $region44: #{tpu_custom_call.1} parent=39 // pred_fallthru
        _
    $region40: #{tpu_custom_call.1} parent=5 // pred_fallthru
      _
  $region6: #{tpu_custom_call.1} parent=0 // loop_footer
    %s13 = sadd.s32 1, %s9
  $region7: #{tpu_custom_call.1} parent=0 // loop_footer_branch
    %8 = sbr.rel target = $region3
  $region8: #{tpu_custom_call.1} parent=0 // loop_exit
    _

</llo_original>
